<compile_context>
chip_gen: v7x
topology: tpu7x:2x2x1
jax: 0.10.0
libtpu: 0.0.40
codegen_flags: <defaults>
</compile_context>

<pallas_src>
import functools

import jax
import jax.numpy as jnp
from jax.experimental import pallas as pl
from jax.experimental.pallas import tpu as pltpu

_LANES = 128
_SUBLANES = 8


def _round_up(x, m):
    return (x + m - 1) // m * m


def _vmem_capacity_bytes(default=64 * 1024 * 1024):
    """Per-TensorCore VMEM capacity; conservative default (v7x) if query fails."""
    try:
        cap = getattr(pltpu.get_tpu_info(), "vmem_capacity_bytes", None)
        if cap:
            return int(cap)
    except Exception:
        pass
    return default


def _ce_partial_kernel(logits_ref, labels_ref, out_ref, *,
                       n_rows, row_tile, vocab, vocab_chunk):
    """Per-tile cross-entropy partial sums (ignore_index == -1).

    Each grid step handles `row_tile` rows of the (N, V) logits.  The vocab is
    consumed in chunks so only (row_tile, vocab_chunk) f32 temporaries exist.
    The tile's [sum_of_losses, num_valid_rows] are packed into a single
    lane-dense (8, 128) output block (loss in lanes [0,64), count in [64,128),
    each scaled by 1/512 so a contiguous host-side sum recovers the totals).
    """
    labels = labels_ref[...]                                   # (row_tile, 1) int32

    row0 = pl.program_id(0) * row_tile
    row_ids = row0 + jax.lax.broadcasted_iota(jnp.int32, (row_tile, 1), 0)
    valid = jnp.logical_and(labels != -1, row_ids < n_rows)    # (row_tile, 1) bool

    num_chunks = -(-vocab // vocab_chunk)
    in_dtype = logits_ref.dtype

    # Pass 1: running per-row max over vocab chunks, in the native input dtype
    # (max never rounds, so bf16 is exact; avoids a full-tile f32 upcast).
    m = jnp.full((row_tile, 1), -jnp.inf, dtype=in_dtype)
    for c in range(num_chunks):
        c0 = c * vocab_chunk
        c1 = min(vocab, c0 + vocab_chunk)
        chunk = logits_ref[:, c0:c1]
        m = jnp.maximum(m, jnp.max(chunk, axis=-1, keepdims=True))
    m = m.astype(jnp.float32)                                  # (row_tile, 1)

    # Pass 2: per chunk, upcast + shift once and accumulate BOTH the exp-sum and
    # the picked-label (shifted) logit from the same loaded chunk.
    sum_exp = jnp.zeros((row_tile, 1), jnp.float32)
    picked = jnp.zeros((row_tile, 1), jnp.float32)
    for c in range(num_chunks):
        c0 = c * vocab_chunk
        c1 = min(vocab, c0 + vocab_chunk)
        shifted = logits_ref[:, c0:c1].astype(jnp.float32) - m  # (row_tile, cw)
        sum_exp = sum_exp + jnp.sum(jnp.exp(shifted), axis=-1, keepdims=True)
        cols = c0 + jax.lax.broadcasted_iota(jnp.int32, (1, c1 - c0), 1)
        picked = picked + jnp.sum(
            jnp.where(cols == labels, shifted, 0.0), axis=-1, keepdims=True)

    # Per-row mask BEFORE any cross-row reduction (garbage rows never propagate).
    per_row = jnp.where(valid, jnp.log(sum_exp) - picked, 0.0)  # (row_tile, 1)

    tile_loss = jnp.sum(per_row, keepdims=True)                 # (1, 1)
    tile_cnt = jnp.sum(valid.astype(jnp.float32), keepdims=True)

    # Pack both partial scalars into one lane-dense (8, 128) block.  Scale by
    # 1/(8*64) (a power of two, exact) so summing the 512 replicated cells on
    # the host recovers the exact partial.
    lane = jax.lax.broadcasted_iota(jnp.int32, (_SUBLANES, _LANES), 1)
    scale = 1.0 / (_SUBLANES * (_LANES // 2))
    out_ref[...] = jnp.where(lane < (_LANES // 2),
                             tile_loss * scale, tile_cnt * scale)


def _cross_entropy_mean_pallas(logits, labels, *, row_cap=512, vocab_chunk=2048):
    """Mean cross-entropy over rows whose label != -1 (PyTorch CrossEntropyLoss
    with ignore_index=-1, reduction='mean'), streaming the logits once.

    Note: if every label is -1 the result is 0/0 = NaN, matching PyTorch's
    reduction='mean' behavior for all-ignored batches.
    """
    n, v = logits.shape
    labels = labels.reshape(n, 1).astype(jnp.int32)

    vocab_chunk = int(min(vocab_chunk, v))

    # Per-generation VMEM budgets: v7x has 64 MiB/TC, v5e/v6e have 128 MiB.
    vmem_cap = _vmem_capacity_bytes()
    block_budget = max(8 * 1024 * 1024,
                       min(vmem_cap // 2 - 8 * 1024 * 1024, 40 * 1024 * 1024))
    vmem_limit = max(32 * 1024 * 1024,
                     min(vmem_cap - 12 * 1024 * 1024, 64 * 1024 * 1024))

    # Bytes per row = double-buffered native-dtype logits block
    #               + ~3 live (row_tile, vocab_chunk) f32 chunk temporaries
    #               + labels / output noise.
    itemsize = jnp.dtype(logits.dtype).itemsize
    bytes_per_row = 2 * v * itemsize + 3 * vocab_chunk * 4 + 16
    fit_rows = max(_SUBLANES,
                   block_budget // bytes_per_row // _SUBLANES * _SUBLANES)
    row_tile = int(min(fit_rows, row_cap, _round_up(n, _SUBLANES)))
    # Keep >= 2 grid steps whenever there is enough work so the "parallel" row
    # axis can split across both v7x TensorCores.
    if n > _SUBLANES:
        row_tile = int(min(row_tile, _round_up(-(-n // 2), _SUBLANES)))
    num_tiles = -(-n // row_tile)

    kernel = functools.partial(_ce_partial_kernel, n_rows=n, row_tile=row_tile,
                               vocab=v, vocab_chunk=vocab_chunk)

    part = pl.pallas_call(
        kernel,
        out_shape=jax.ShapeDtypeStruct((num_tiles * _SUBLANES, _LANES),
                                       jnp.float32),
        grid_spec=pltpu.PrefetchScalarGridSpec(
            num_scalar_prefetch=0,
            grid=(num_tiles,),
            in_specs=[
                pl.BlockSpec((row_tile, v), lambda i: (i, 0)),
                pl.BlockSpec((row_tile, 1), lambda i: (i, 0)),
            ],
            out_specs=pl.BlockSpec((_SUBLANES, _LANES), lambda i: (i, 0)),
        ),
        compiler_params=pltpu.CompilerParams(
            dimension_semantics=("parallel",),
            vmem_limit_bytes=int(vmem_limit),
        ),
    )(logits, labels)

    # Contiguous host-side reduction: each tile replicated loss/512 in lanes
    # [0,64) and count/512 in lanes [64,128) across all 8 sublanes.
    loss_sum = jnp.sum(part[:, : _LANES // 2])
    cnt = jnp.sum(part[:, _LANES // 2:])
    return loss_sum / cnt


def _cross_entropy_mean_jax(logits, labels):
    """Plain-JAX mean CE with ignore_index=-1 (used for the tiny NSP head and as
    the correctness reference)."""
    logits = logits.astype(jnp.float32)
    labels = labels.astype(jnp.int32)
    valid = labels != -1
    lse = jax.scipy.special.logsumexp(logits, axis=-1)
    safe = jnp.clip(labels, 0, logits.shape[-1] - 1)
    picked = jnp.take_along_axis(logits, safe[:, None], axis=-1)[:, 0]
    nll = jnp.where(valid, lse - picked, 0.0)
    return jnp.sum(nll) / jnp.sum(valid.astype(jnp.float32))


def bert_pretraining_criterion(prediction_scores, masked_lm_labels, vocab_size,
                               seq_relationship_score=None,
                               next_sentence_labels=None):
    """JAX/Pallas equivalent of BertPretrainingCriterion.forward."""
    mlm_loss = _cross_entropy_mean_pallas(
        prediction_scores.reshape(-1, vocab_size),
        masked_lm_labels.reshape(-1))
    if seq_relationship_score is not None and next_sentence_labels is not None:
        # NSP head is a few-KB (B, 2) tensor; a dedicated pallas_call would be
        # pure launch/DMA overhead, so compute it in plain JAX.
        nsp_loss = _cross_entropy_mean_jax(
            seq_relationship_score.reshape(-1, 2),
            next_sentence_labels.reshape(-1))
        return mlm_loss + nsp_loss
    return mlm_loss


def _reference_loss(prediction_scores, masked_lm_labels, vocab_size,
                    seq_relationship_score, next_sentence_labels):
    mlm = _cross_entropy_mean_jax(prediction_scores.reshape(-1, vocab_size),
                                  masked_lm_labels.reshape(-1))
    nsp = _cross_entropy_mean_jax(seq_relationship_score.reshape(-1, 2),
                                  next_sentence_labels.reshape(-1))
    return mlm + nsp


if __name__ == "__main__":
    batch, seq, vocab = 2, 8, 512

    key = jax.random.PRNGKey(0)
    k1, k2, k3, k4, k5 = jax.random.split(key, 5)

    prediction_scores = jax.random.normal(k1, (batch, seq, vocab), jnp.float32)
    masked_lm_labels = jax.random.randint(k2, (batch, seq), 0, vocab, jnp.int32)
    # Mark roughly half the positions as ignored (-1), as in real MLM batches.
    ignore_mask = jax.random.bernoulli(k3, 0.5, (batch, seq))
    masked_lm_labels = jnp.where(ignore_mask, -1, masked_lm_labels)

    seq_relationship_score = jax.random.normal(k4, (batch, 2), jnp.float32)
    next_sentence_labels = jax.random.randint(k5, (batch,), 0, 2, jnp.int32)

    total_loss = bert_pretraining_criterion(
        prediction_scores, masked_lm_labels, vocab,
        seq_relationship_score, next_sentence_labels)
    total_loss = jax.block_until_ready(total_loss)

    ref = _reference_loss(prediction_scores, masked_lm_labels, vocab,
                          seq_relationship_score, next_sentence_labels)
    assert jnp.allclose(total_loss, ref, rtol=1e-5, atol=1e-5), (total_loss, ref)

    # Extra check: multi-tile parallel grid, ragged last row tile
    # (N % row_tile != 0), multi-chunk vocab loop, and bf16 logits.
    n2, v2 = 40, 512
    kk1, kk2, kk3 = jax.random.split(jax.random.PRNGKey(1), 3)
    logits2 = jax.random.normal(kk1, (n2, v2), jnp.float32).astype(jnp.bfloat16)
    labels2 = jax.random.randint(kk2, (n2,), 0, v2, jnp.int32)
    labels2 = jnp.where(jax.random.bernoulli(kk3, 0.3, (n2,)), -1, labels2)
    got2 = _cross_entropy_mean_pallas(logits2, labels2, row_cap=16, vocab_chunk=128)
    ref2 = _cross_entropy_mean_jax(logits2, labels2)
    got2, ref2 = jax.block_until_ready((got2, ref2))
    assert jnp.allclose(got2, ref2, rtol=1e-3, atol=1e-3), (got2, ref2)

    # Extra check: ragged last vocab chunk (V not a multiple of the chunk size).
    n3, v3 = 24, 384
    kj1, kj2 = jax.random.split(jax.random.PRNGKey(2), 2)
    logits3 = jax.random.normal(kj1, (n3, v3), jnp.float32)
    labels3 = jax.random.randint(kj2, (n3,), -1, v3, jnp.int32)
    got3 = _cross_entropy_mean_pallas(logits3, labels3, row_cap=8, vocab_chunk=256)
    ref3 = _cross_entropy_mean_jax(logits3, labels3)
    got3, ref3 = jax.block_until_ready((got3, ref3))
    assert jnp.allclose(got3, ref3, rtol=1e-5, atol=1e-5), (got3, ref3)

    print("KERNEL_OK")
</pallas_src>

<mosaic_0001>
module attributes {stable_mosaic.version = 11 : i64} {
  func.func @_ce_partial_kernel(%arg0: i32, %arg1: memref<8x512xf32, #tpu.memory_space<vmem>>, %arg2: memref<8x1xi32, #tpu.memory_space<vmem>>, %arg3: memref<8x128xf32, #tpu.memory_space<vmem>>) attributes {dimension_semantics = [#tpu.dimension_semantics<parallel>], iteration_bounds = array<i64: 2>, scalar_prefetch = 0 : i64, scratch_operands = 0 : i64, tpu.core_type = #tpu.core_type<tc>, window_params = [{transform_indices = @transform_0, window_bounds = array<i64: 8, 512>}, {transform_indices = @transform_1, window_bounds = array<i64: 8, 1>}, {transform_indices = @transform_2, window_bounds = array<i64: 8, 128>}]} {
    %c0 = arith.constant 0 : index
    %c0_0 = arith.constant 0 : index
    %0 = vector.load %arg2[%c0, %c0_0] : memref<8x1xi32, #tpu.memory_space<vmem>>, vector<8x1xi32>
    %c8_i32 = arith.constant 8 : i32
    %1 = arith.muli %arg0, %c8_i32 : i32
    %2 = tpu.iota {dimensions = array<i32: 0>} : vector<8x1xi32>
    %3 = vector.broadcast %1 : i32 to vector<8x1xi32>
    %4 = arith.addi %3, %2 : vector<8x1xi32>
    %c-1_i32 = arith.constant -1 : i32
    %5 = vector.broadcast %c-1_i32 : i32 to vector<8x1xi32>
    %6 = arith.cmpi ne, %0, %5 : vector<8x1xi32>
    %c16_i32 = arith.constant 16 : i32
    %7 = vector.broadcast %c16_i32 : i32 to vector<8x1xi32>
    %8 = arith.cmpi slt, %4, %7 : vector<8x1xi32>
    %9 = arith.andi %6, %8 : vector<8x1xi1>
    %cst = arith.constant 0xFF800000 : f32
    %10 = vector.broadcast %cst : f32 to vector<8x1xf32>
    %c0_1 = arith.constant 0 : index
    %c0_2 = arith.constant 0 : index
    %11 = vector.load %arg1[%c0_1, %c0_2] : memref<8x512xf32, #tpu.memory_space<vmem>>, vector<8x512xf32>
    %cst_3 = arith.constant dense<0xFF800000> : vector<8xf32>
    %12 = vector.multi_reduction <maximumf>, %11, %cst_3 [1] : vector<8x512xf32> to vector<8xf32>
    %13 = vector.shape_cast %12 : vector<8xf32> to vector<8x1xf32>
    %14 = arith.maximumf %10, %13 : vector<8x1xf32>
    %cst_4 = arith.constant 0.000000e+00 : f32
    %15 = vector.broadcast %cst_4 : f32 to vector<8x1xf32>
    %cst_5 = arith.constant 0.000000e+00 : f32
    %16 = vector.broadcast %cst_5 : f32 to vector<8x1xf32>
    %c0_6 = arith.constant 0 : index
    %c0_7 = arith.constant 0 : index
    %17 = vector.load %arg1[%c0_6, %c0_7] : memref<8x512xf32, #tpu.memory_space<vmem>>, vector<8x512xf32>
    %18 = vector.broadcast %14 : vector<8x1xf32> to vector<8x512xf32>
    %19 = arith.subf %17, %18 : vector<8x512xf32>
    %20 = math.exp %19 : vector<8x512xf32>
    %cst_8 = arith.constant dense<0.000000e+00> : vector<8xf32>
    %21 = vector.multi_reduction <add>, %20, %cst_8 [1] : vector<8x512xf32> to vector<8xf32>
    %22 = vector.shape_cast %21 : vector<8xf32> to vector<8x1xf32>
    %23 = arith.addf %15, %22 : vector<8x1xf32>
    %24 = tpu.iota {dimensions = array<i32: 1>} : vector<1x512xi32>
    %c0_i32 = arith.constant 0 : i32
    %25 = vector.broadcast %c0_i32 : i32 to vector<1x512xi32>
    %26 = arith.addi %25, %24 : vector<1x512xi32>
    %27 = vector.broadcast %26 : vector<1x512xi32> to vector<8x512xi32>
    %28 = vector.broadcast %0 : vector<8x1xi32> to vector<8x512xi32>
    %29 = arith.cmpi eq, %27, %28 : vector<8x512xi32>
    %cst_9 = arith.constant 0.000000e+00 : f32
    %30 = vector.broadcast %cst_9 : f32 to vector<8x512xf32>
    %31 = arith.select %29, %19, %30 : vector<8x512xi1>, vector<8x512xf32>
    %cst_10 = arith.constant dense<0.000000e+00> : vector<8xf32>
    %32 = vector.multi_reduction <add>, %31, %cst_10 [1] : vector<8x512xf32> to vector<8xf32>
    %33 = vector.shape_cast %32 : vector<8xf32> to vector<8x1xf32>
    %34 = arith.addf %16, %33 : vector<8x1xf32>
    %35 = math.log %23 : vector<8x1xf32>
    %36 = arith.subf %35, %34 : vector<8x1xf32>
    %cst_11 = arith.constant 0.000000e+00 : f32
    %37 = vector.broadcast %cst_11 : f32 to vector<8x1xf32>
    %38 = arith.select %9, %36, %37 : vector<8x1xi1>, vector<8x1xf32>
    %39 = vector.shape_cast %38 : vector<8x1xf32> to vector<1x8x1xf32>
    %cst_12 = arith.constant dense<0.000000e+00> : vector<1xf32>
    %40 = vector.multi_reduction <add>, %39, %cst_12 [1, 2] : vector<1x8x1xf32> to vector<1xf32>
    %41 = vector.shape_cast %40 : vector<1xf32> to vector<1x1x1xf32>
    %42 = vector.extract %41[0, 0, 0] : f32 from vector<1x1x1xf32>
    %43 = vector.broadcast %42 : f32 to vector<1x1xf32>
    %44 = arith.extui %9 : vector<8x1xi1> to vector<8x1xi32>
    %45 = arith.sitofp %44 : vector<8x1xi32> to vector<8x1xf32>
    %46 = vector.shape_cast %45 : vector<8x1xf32> to vector<1x8x1xf32>
    %cst_13 = arith.constant dense<0.000000e+00> : vector<1xf32>
    %47 = vector.multi_reduction <add>, %46, %cst_13 [1, 2] : vector<1x8x1xf32> to vector<1xf32>
    %48 = vector.shape_cast %47 : vector<1xf32> to vector<1x1x1xf32>
    %49 = vector.extract %48[0, 0, 0] : f32 from vector<1x1x1xf32>
    %50 = vector.broadcast %49 : f32 to vector<1x1xf32>
    %51 = tpu.iota {dimensions = array<i32: 1>} : vector<8x128xi32>
    %c64_i32 = arith.constant 64 : i32
    %52 = vector.broadcast %c64_i32 : i32 to vector<8x128xi32>
    %53 = arith.cmpi slt, %51, %52 : vector<8x128xi32>
    %cst_14 = arith.constant 0.001953125 : f32
    %54 = vector.broadcast %cst_14 : f32 to vector<1x1xf32>
    %55 = arith.mulf %43, %54 : vector<1x1xf32>
    %cst_15 = arith.constant 0.001953125 : f32
    %56 = vector.broadcast %cst_15 : f32 to vector<1x1xf32>
    %57 = arith.mulf %50, %56 : vector<1x1xf32>
    %58 = vector.shape_cast %55 : vector<1x1xf32> to vector<1x1xf32>
    %59 = vector.broadcast %58 : vector<1x1xf32> to vector<8x128xf32>
    %60 = vector.shape_cast %57 : vector<1x1xf32> to vector<1x1xf32>
    %61 = vector.broadcast %60 : vector<1x1xf32> to vector<8x128xf32>
    %62 = arith.select %53, %59, %61 : vector<8x128xi1>, vector<8x128xf32>
    %c0_16 = arith.constant 0 : index
    %c0_17 = arith.constant 0 : index
    %63 = vector.load %arg3[%c0_16, %c0_17] : memref<8x128xf32, #tpu.memory_space<vmem>>, vector<8x128xf32>
    tpu.vector_store %arg3[%c0_16, %c0_17], %62 {strides = array<i32>} : memref<8x128xf32, #tpu.memory_space<vmem>>, vector<8x128xf32>,
    return
  }
  func.func @transform_0(%arg0: i32) -> (i32, i32) {
    %c0_i32 = arith.constant 0 : i32
    %c0_i32_0 = arith.constant 0 : i32
    return %arg0, %c0_i32 : i32, i32
  }
  func.func @transform_1(%arg0: i32) -> (i32, i32) {
    %c0_i32 = arith.constant 0 : i32
    %c0_i32_0 = arith.constant 0 : i32
    return %arg0, %c0_i32 : i32, i32
  }
  func.func @transform_2(%arg0: i32) -> (i32, i32) {
    %c0_i32 = arith.constant 0 : i32
    %c0_i32_0 = arith.constant 0 : i32
    return %arg0, %c0_i32 : i32, i32
  }
}

</mosaic_0001>

<llo_original>
// kernel: tpu_custom_call.1
$region0: #{tpu_custom_call.1}
  #allocation0 [shape = 'u32[]', space=smem, size = 0x4, offset = 0x4, fixed_abs, tag = 'smem constant byte address 0x4 - core index']
  #allocation1 [shape = 'u32[144,128]{1,0:T(1,128)}', space=vmem, size = 0x12000, scoped, tag = 'internal scratch']
  %s0 = inlined_call_operand.hbm [shape: f32[16,512], index: 0, kind: input, shape index: {}]
  %s1 = inlined_call_operand.vmem [shape: s32[16,1], index: 1, kind: input, shape index: {}]
  %s2 = inlined_call_operand.hbm [shape: f32[16,128], index: 2, kind: output, shape index: {}]
  %s3 = sld [smem:[#allocation0]]
  $region45: #{tpu_custom_call.1} parent=0
    _
  %s5 = ssub.s32 1, %s3
  %s6 = scalar_select 0, %s5, %s3
  $region1: #{tpu_custom_call.1} parent=0
    #allocation2 [shape = 'u8[32768]{0}', space=vmem, size = 0x8000, scoped, tag = 'input window, operand 0']
    #allocation3 [shape = 's32[2]{0}', space=sflag, size = 0x8, scoped, tag = 'scoped memory for tpu_custom_call.1']
    #allocation4 [shape = 's32[2]{0}', space=sflag, size = 0x8, scoped, tag = 'scoped memory for tpu_custom_call.1']
    #allocation5 [shape = 'u8[8192]{0}', space=vmem, size = 0x2000, scoped, tag = 'output window, operand 0']
    %7 = vsyncpa [#allocation3], 0
    %s8 = scalar_lea.sflag [#allocation3], 1
    %9 = vsyncpa %s8, 0
    %10 = vsyncpa [#allocation4], 0
    %s11 = scalar_lea.sflag [#allocation4], 1
    %12 = vsyncpa %s11, 0
    loop: start=0, step=1, limit=4
    $region2: #{tpu_custom_call.1} parent=1 // loop_pre_header
      _
    $region3: #{tpu_custom_call.1} parent=1 // loop_header
      %s14 = sphi 0, %s18
      %p15 = scmp.ge.s32.totalorder %s14, 4
      %s24 = sphi 0, %s26
      %s27 = sphi 0, %s24
      %s28 = sphi 0, %s27
      %s44 = sphi 0, %s28
      %s50 = sphi 0, %s52
      %s53 = sphi 0, %s50
      %s54 = sphi 0, %s53
      %s70 = sphi 0, %s54
      %s76 = sphi 0, %s78
      %s79 = sphi 0, %s76
      %s80 = sphi 0, %s79
      %s96 = sphi 0, %s80
    $region4: #{tpu_custom_call.1} parent=1 // loop_header_branch
      %17 = sbr.rel (%p15) target = $region8
    $region5: #{tpu_custom_call.1} parent=1 // loop_body
      %s19 = ssub.s32 %s14, 1
      %s20 = ssub.s32 %s14, 2
      %s21 = sadd.s32 %s14, 1
      %s22 = ssub.s32 %s14, %s21
      %p23 = scmp.eq.s32.totalorder %s22, 0
      %s25 = sadd.s32 %s24, 1
      %s26 = scalar_select %p23, %s24, %s25
      %p29 = pneg %p23
      %p30 = scmp.eq.s32.totalorder %s14, 1
      %p31 = por %p29, %p30
      %p32 = scmp.ne.s32.totalorder %s24, %s27
      %p33 = scmp.eq.s32.totalorder %s14, 0
      %p34 = por %p32, %p33
      %p35 = scmp.ne.s32.totalorder %s24, %s27
      %p36 = scmp.eq.s32.totalorder %s19, 1
      %p37 = por %p35, %p36
      %p38 = scmp.ne.s32.totalorder %s27, %s28
      %p39 = scmp.eq.s32.totalorder %s19, 0
      %p40 = por %p38, %p39
      %p41 = scmp.ne.s32.totalorder %s27, %s28
      %p42 = scmp.eq.s32.totalorder %s20, 1
      %p43 = por %p41, %p42
      %p45 = scmp.ne.s32.totalorder %s28, %s44
      %p46 = scmp.eq.s32.totalorder %s20, 0
      %p47 = por %p45, %p46
      %s48 = ssub.s32 %s14, %s21
      %p49 = scmp.eq.s32.totalorder %s48, 0
      %s51 = sadd.s32 %s50, 1
      %s52 = scalar_select %p49, %s50, %s51
      %p55 = pneg %p49
      %p56 = scmp.eq.s32.totalorder %s14, 1
      %p57 = por %p55, %p56
      %p58 = scmp.ne.s32.totalorder %s50, %s53
      %p59 = scmp.eq.s32.totalorder %s14, 0
      %p60 = por %p58, %p59
      %p61 = scmp.ne.s32.totalorder %s50, %s53
      %p62 = scmp.eq.s32.totalorder %s19, 1
      %p63 = por %p61, %p62
      %p64 = scmp.ne.s32.totalorder %s53, %s54
      %p65 = scmp.eq.s32.totalorder %s19, 0
      %p66 = por %p64, %p65
      %p67 = scmp.ne.s32.totalorder %s53, %s54
      %p68 = scmp.eq.s32.totalorder %s20, 1
      %p69 = por %p67, %p68
      %p71 = scmp.ne.s32.totalorder %s54, %s70
      %p72 = scmp.eq.s32.totalorder %s20, 0
      %p73 = por %p71, %p72
      %s74 = ssub.s32 %s14, %s21
      %p75 = scmp.eq.s32.totalorder %s74, 0
      %s77 = sadd.s32 %s76, 1
      %s78 = scalar_select %p75, %s76, %s77
      %p81 = pneg %p75
      %p82 = scmp.eq.s32.totalorder %s14, 1
      %p83 = por %p81, %p82
      %p84 = scmp.ne.s32.totalorder %s76, %s79
      %p85 = scmp.eq.s32.totalorder %s14, 0
      %p86 = por %p84, %p85
      %p87 = scmp.ne.s32.totalorder %s76, %s79
      %p88 = scmp.eq.s32.totalorder %s19, 1
      %p89 = por %p87, %p88
      %p90 = scmp.ne.s32.totalorder %s79, %s80
      %p91 = scmp.eq.s32.totalorder %s19, 0
      %p92 = por %p90, %p91
      %p93 = scmp.ne.s32.totalorder %s79, %s80
      %p94 = scmp.eq.s32.totalorder %s20, 1
      %p95 = por %p93, %p94
      %p97 = scmp.ne.s32.totalorder %s80, %s96
      %p98 = scmp.eq.s32.totalorder %s20, 0
      %p99 = por %p97, %p98
      %p100 = scmp.le.s32.totalorder 1, %s14
      %p101 = scmp.lt.s32.totalorder %s14, 3
      %p102 = pnand %p100, %p101
      %p103 = pneg %p102
      // Predicated region
      $region9: #{tpu_custom_call.1} parent=5 // pred_check
        _
      $region10: #{tpu_custom_call.1} parent=5 // pred_check_branch
        %105 = sbr.rel (%p102) target = $region12
      $region11: #{tpu_custom_call.1} parent=5 // pred_region
        %s106 = ssub.s32 %s14, 1
      $region12: #{tpu_custom_call.1} parent=5 // pred_fallthru
        _
      %p107 = scmp.lt.s32.totalorder %s14, 2
      // Predicated region
      $region13: #{tpu_custom_call.1} parent=5 // pred_check
        %p108 = pneg %p107
      $region14: #{tpu_custom_call.1} parent=5 // pred_check_branch
        %110 = sbr.rel (%p108) target = $region16
      $region15: #{tpu_custom_call.1} parent=5 // pred_region
        // Predicated region
        $region17: #{tpu_custom_call.1} parent=15 // pred_check
          %p111 = pneg %p34
        $region18: #{tpu_custom_call.1} parent=15 // pred_check_branch
          %113 = sbr.rel (%p111) target = $region20
        $region19: #{tpu_custom_call.1} parent=15 // pred_region
          %s114 = sand.u32 %s24, 1
          %s115 = scalar_lea.sflag [#allocation3], %s114
          %s116 = sand.u32 %s24, 1
          %s117 = smul.addr %s116, 32
          %s118 = scalar_lea.vmem [#allocation2], %s117
          %s120 = ssub.s32 512, 512
          %121 = vsyncadd %s115, %s120
          %s122 = smul.addr %s14, 4
          %s123 = smul.addr %s122, 128
          %s124 = scalar_lea.hbm %s0, %s123
          %s126 = sshll.u32 %s118, 4
          %s127 = int_to_ptr.vmem [resolvable:$true] %s126
          %129 = dma.hbm_to_vmem [thread:$0]  %s124, 512, %s127, %s115
        $region20: #{tpu_custom_call.1} parent=15 // pred_fallthru
          _
        // Predicated region
        $region21: #{tpu_custom_call.1} parent=15 // pred_check
          %p130 = pneg %p60
        $region22: #{tpu_custom_call.1} parent=15 // pred_check_branch
          %132 = sbr.rel (%p130) target = $region24
        $region23: #{tpu_custom_call.1} parent=15 // pred_region
          %p133 = scmp.lt.s32.totalorder %s14, 1
          %s134 = scalar_select %p133, %s14, 1
          %s135 = smul.addr %s134, 8
          %s136 = scalar_lea.vmem %s1, %s135
        $region24: #{tpu_custom_call.1} parent=15 // pred_fallthru
          _
      $region16: #{tpu_custom_call.1} parent=5 // pred_fallthru
        _
      %p137 = scmp.le.s32.totalorder 1, %s14
      %p138 = scmp.lt.s32.totalorder %s14, 3
      %p139 = pnand %p137, %p138
      %p140 = pneg %p139
      // Predicated region
      $region25: #{tpu_custom_call.1} parent=5 // pred_check
        _
      $region26: #{tpu_custom_call.1} parent=5 // pred_check_branch
        %142 = sbr.rel (%p139) target = $region28
      $region27: #{tpu_custom_call.1} parent=5 // pred_region
        %s143 = ssub.s32 %s14, 1
        %s144 = sand.u32 %s27, 1
        %s145 = scalar_lea.sflag [#allocation3], %s144
        %s146 = sand.u32 %s27, 1
        %s147 = smul.addr %s146, 32
        %s148 = scalar_lea.vmem [#allocation2], %s147
        // Predicated region
        $region29: #{tpu_custom_call.1} parent=27 // pred_check
          %p149 = pneg %p40
        $region30: #{tpu_custom_call.1} parent=27 // pred_check_branch
          %151 = sbr.rel (%p149) target = $region32
        $region31: #{tpu_custom_call.1} parent=27 // pred_region
          %152 = dma.done %s145, 512
        $region32: #{tpu_custom_call.1} parent=27 // pred_fallthru
          _
        %s153 = sand.u32 %s27, 1
        %s154 = scalar_lea.sflag [#allocation3], %s153
        %s155 = sand.u32 %s27, 1
        %s156 = smul.addr %s155, 32
        %s157 = scalar_lea.vmem [#allocation2], %s156
        %p158 = pneg %p40
        %p159 = pneg %p37
        %p160 = scmp.lt.s32.totalorder %s19, 1
        %s161 = scalar_select %p160, %s19, 1
        %s162 = smul.addr %s161, 8
        %s163 = scalar_lea.vmem %s1, %s162
        %p164 = pneg %p66
        %p165 = pneg %p63
        %p166 = pneg %p92
        %p167 = pneg %p89
        %s168 = sand.u32 %s79, 1
        %s169 = scalar_lea.sflag [#allocation4], %s168
        %s170 = sand.u32 %s79, 1
        %s171 = smul.addr %s170, 8
        %s172 = scalar_lea.vmem [#allocation5], %s171
        %p173 = scmp.lt.s32.totalorder %s19, 1
        %s174 = scalar_select %p173, %s19, 1
        %s175 = smul.addr %s174, 8
        %s176 = scalar_lea.vmem %s1, %s175
        %v177 = vld [vmem:[%s176] sm:$0xff]
        %s178 = smul.u32 %s19, 8
        %v179 = vlaneseq
        %v180 = vshrl.u32 %v179, 7
        %v181 = vstv %s178
        %v182 = vadd.s32 %v181, %v180
        %vm183 = vcmp.ne.s32.totalorder %v177, 4294967295
        %vm184 = vcmp.lt.s32.totalorder %v182, 16
        %vm185 = vmand %vm183, %vm184
        %v186 = vld [vmem:[%s148] sm:$0xff]
        %v187 = vld [vmem:[%s148 + $0x8] sm:$0xff]
        %v188 = vld [vmem:[%s148 + $0x10] sm:$0xff]
        %v189 = vld [vmem:[%s148 + $0x18] sm:$0xff]
        %v190 = vmax.f32 %v186, %v187
        %v191 = vmax.f32 %v188, %v189
        %v192 = vmax.f32 %v190, %v191
        %193 = vmax.xlane.f32.xlu0 %v192
        %v194 = vpop.xlane.xlu0 %193
        %v195 = vsub.f32 %v186, %v194
        %v196 = vsub.f32 %v187, %v194
        %v197 = vsub.f32 %v188, %v194
        %v198 = vsub.f32 %v189, %v194
        %v199 = vmul.f32 %v195, 1.442695
        %v200 = vpow.pop %v199
        %v201 = vmul.f32 %v196, 1.442695
        %v202 = vpow.pop %v201
        %v203 = vmul.f32 %v197, 1.442695
        %v204 = vpow.pop %v203
        %v205 = vmul.f32 %v198, 1.442695
        %v206 = vpow.pop %v205
        %v207 = vadd.f32 %v200, %v202
        %v208 = vadd.f32 %v207, %v204
        %v209 = vadd.f32 %v208, %v206
        %210 = vadd.xlane.f32.xlu0 %v209
        %v211 = vpop.xlane.xlu0 %210
        %v212 = vadd.f32 %v211, 0.0
        %v213 = vlaneseq
        %v214 = vand.u32 %v213, 127
        %v215 = vadd.s32 %v214, 128
        %v216 = vadd.s32 %v214, 256
        %v217 = vadd.s32 %v214, 384
        %218 = vset.pattern.permute.xlu0 0
        %219 = vperm.xlu0 %218, %v177
        %v220 = vpop.permute.xlu0 %219
        %vm221 = vcmp.eq.s32.totalorder %v214, %v220
        %vm222 = vcmp.eq.s32.totalorder %v215, %v220
        %vm223 = vcmp.eq.s32.totalorder %v216, %v220
        %vm224 = vcmp.eq.s32.totalorder %v217, %v220
        %v225 = vsel %vm221, %v195, 0.0
        %v226 = vsel %vm222, %v196, 0.0
        %v227 = vsel %vm223, %v197, 0.0
        %v228 = vsel %vm224, %v198, 0.0
        %v229 = vadd.f32 %v225, %v226
        %v230 = vadd.f32 %v229, %v227
        %v231 = vadd.f32 %v230, %v228
        %232 = vadd.xlane.f32.xlu0 %v231
        %v233 = vpop.xlane.xlu0 %232
        %v234 = vadd.f32 %v233, 0.0
        %v235 = vlog2.pop %v212
        %v236 = vmul.f32 %v235, 0.6931472
        %v237 = vsub.f32 %v236, %v234
        %v238 = vsel %vm185, %v237, 0.0
        %vm239 = vcmask 7168
        %v240 = vsel %vm239, %v238, 0.0
        %241 = vadd.xlane.f32.xlu0 %v240
        %v242 = vpop.xlane.xlu0 %241
        %v243 = vrot.slane %v242, 4
        %v244 = vadd.f32 %v242, %v243
        %v245 = vrot.slane %v244, 2
        %v246 = vadd.f32 %v244, %v245
        %v247 = vrot.slane %v246, 1
        %v248 = vadd.f32 %v246, %v247
        %s249 = vtos %v248
        %v250 = vstv %s249
        %v251 = vsel %vm185, 1, 0
        %v252 = vcvt.s32.f32 %v251
        %v253 = vsel %vm239, %v252, 0.0
        %254 = vadd.xlane.f32.xlu0 %v253
        %v255 = vpop.xlane.xlu0 %254
        %v256 = vrot.slane %v255, 4
        %v257 = vadd.f32 %v255, %v256
        %v258 = vrot.slane %v257, 2
        %v259 = vadd.f32 %v257, %v258
        %v260 = vrot.slane %v259, 1
        %v261 = vadd.f32 %v259, %v260
        %s262 = vtos %v261
        %v263 = vstv %s262
        %vm264 = vcmp.lt.s32.totalorder %v214, 64
        %v265 = vmul.f32 %v250, 0.001953125
        %v266 = vmul.f32 %v263, 0.001953125
        %v267 = vsel %vm264, %v265, %v266
        %268 = vst [vmem:[%s172] sm:$0xff] %v267
        %s269 = sand.u32 %s79, 1
        %s270 = scalar_lea.sflag [#allocation4], %s269
        %s271 = sand.u32 %s79, 1
        %s272 = smul.addr %s271, 8
        %s273 = scalar_lea.vmem [#allocation5], %s272
        // Predicated region
        $region33: #{tpu_custom_call.1} parent=27 // pred_check
          %p274 = pneg %p89
        $region34: #{tpu_custom_call.1} parent=27 // pred_check_branch
          %276 = sbr.rel (%p274) target = $region36
        $region35: #{tpu_custom_call.1} parent=27 // pred_region
          %s278 = ssub.s32 128, 128
          %279 = vsyncadd %s270, %s278
          %s280 = smul.addr %s19, 128
          %s281 = scalar_lea.hbm %s2, %s280
          %s283 = sshll.u32 %s273, 4
          %s284 = int_to_ptr.vmem [resolvable:$true] %s283
          %286 = dma.vmem_to_hbm [thread:$0]  %s284, 128, %s281, %s270
        $region36: #{tpu_custom_call.1} parent=27 // pred_fallthru
          _
      $region28: #{tpu_custom_call.1} parent=5 // pred_fallthru
        _
      %p287 = scmp.le.s32.totalorder 2, %s14
      // Predicated region
      $region37: #{tpu_custom_call.1} parent=5 // pred_check
        %p288 = pneg %p287
      $region38: #{tpu_custom_call.1} parent=5 // pred_check_branch
        %290 = sbr.rel (%p288) target = $region40
      $region39: #{tpu_custom_call.1} parent=5 // pred_region
        %s291 = ssub.s32 %s14, 2
        // Predicated region
        $region41: #{tpu_custom_call.1} parent=39 // pred_check
          %p292 = pneg %p95
        $region42: #{tpu_custom_call.1} parent=39 // pred_check_branch
          %294 = sbr.rel (%p292) target = $region44
        $region43: #{tpu_custom_call.1} parent=39 // pred_region
          %s295 = sand.u32 %s80, 1
          %s296 = scalar_lea.sflag [#allocation4], %s295
          %s297 = sand.u32 %s80, 1
          %s298 = smul.addr %s297, 8
          %s299 = scalar_lea.vmem [#allocation5], %s298
          %300 = dma.done %s296, 128
        $region44: #{tpu_custom_call.1} parent=39 // pred_fallthru
          _
      $region40: #{tpu_custom_call.1} parent=5 // pred_fallthru
        _
    $region6: #{tpu_custom_call.1} parent=1 // loop_footer
      %s18 = sadd.s32 1, %s14
    $region7: #{tpu_custom_call.1} parent=1 // loop_footer_branch
      %13 = sbr.rel target = $region3
    $region8: #{tpu_custom_call.1} parent=1 // loop_exit
      _
    %301 = vsyncpa [#allocation3], 1
    %s302 = scalar_lea.sflag [#allocation3], 1
    %303 = vsyncpa %s302, 1
    %304 = vsyncpa [#allocation4], 1
    %s305 = scalar_lea.sflag [#allocation4], 1
    %306 = vsyncpa %s305, 1

</llo_original>
